<compile_context>
chip_gen: v7x
topology: tpu7x:2x2x1
jax: 0.10.0
libtpu: 0.0.40
codegen_flags: <defaults>
</compile_context>

<pallas_src>
import jax
import jax.numpy as jnp
import numpy as np
from jax import lax
from jax.experimental import pallas as pl
from jax.experimental.pallas import tpu as pltpu


def graph_reasoning_kernel(x_ref, wq_ref, bq_ref, wk_ref, bk_ref,
                           wg_ref, bg_ref, o_ref):
    # x_ref: (TB, N, D) block; w*_ref: (D, D) pre-transposed; b*_ref: (1, D).
    tb, n, d = x_ref.shape
    x3 = x_ref[...]                                    # (TB, N, D)
    x2 = x3.reshape(tb * n, d)                         # leading-dim merge (layout no-op)

    # Fused query/key projections for the whole batch block.
    q2 = jnp.dot(x2, wq_ref[...], preferred_element_type=jnp.float32) + bq_ref[...]
    k2 = jnp.dot(x2, wk_ref[...], preferred_element_type=jnp.float32) + bk_ref[...]
    q = q2.reshape(tb, n, d)
    k = k2.reshape(tb, n, d)

    # Edge logits: batched q @ k^T via dot_general (contract last dims, no .T).
    s = lax.dot_general(q, k,
                        dimension_numbers=(((2,), (2,)), ((0,), (0,))),
                        preferred_element_type=jnp.float32)        # (TB, N, N)

    # Softmax over the edge axis, kept in f32 on the VPU/EUP.
    s = s - jnp.max(s, axis=-1, keepdims=True)
    e = jnp.exp(s)
    e = e * pl.reciprocal(jnp.sum(e, axis=-1, keepdims=True), approx=True)

    # Message passing: (TB, N, N) @ (TB, N, D); MXU operands in the input
    # dtype (bf16-native if inputs are bf16), f32 accumulation.
    sgr = lax.dot_general(e.astype(x3.dtype), x3,
                          dimension_numbers=(((2,), (1,)), ((0,), (0,))),
                          preferred_element_type=jnp.float32)      # (TB, N, D)

    # Output linear + ReLU as one big (TB*N, D) matmul.
    out2 = jnp.dot(sgr.reshape(tb * n, d).astype(x3.dtype), wg_ref[...],
                   preferred_element_type=jnp.float32) + bg_ref[...]
    out = jnp.maximum(out2, 0.0).reshape(tb, n, d)
    o_ref[...] = out.astype(o_ref.dtype)


def _pick_block_b(batch, max_block=16):
    """Largest batch-block <= max_block that still leaves >= 2 grid steps
    (so both TensorCores get work on megacore / v7x parts)."""
    if batch <= 1:
        return 1
    return max(1, min(max_block, pl.cdiv(batch, 2)))


def graph_reasoning(sim_emb, wq, bq, wk, bk, wg, bg, block_b=None):
    """sim_emb: (B, N, D); w*: (D, D) PyTorch-style (out, in); b*: (D,)."""
    B, N, D = sim_emb.shape
    if block_b is None:
        block_b = _pick_block_b(B)

    # Pad the batch so it divides evenly into blocks (sliced off at the end).
    b_pad = pl.cdiv(B, block_b) * block_b
    x = sim_emb
    if b_pad != B:
        x = jnp.concatenate(
            [x, jnp.zeros((b_pad - B, N, D), dtype=sim_emb.dtype)], axis=0)
    grid_b = b_pad // block_b

    # Pre-transpose weights so the kernel computes x @ W (nn.Linear: x @ W.T + b);
    # biases become (1, D) broadcast rows.
    wq_t, wk_t, wg_t = wq.T, wk.T, wg.T
    bq2, bk2, bg2 = bq.reshape(1, D), bk.reshape(1, D), bg.reshape(1, D)

    # NOTE: weight index_maps are constant across the grid; for large D
    # (>= ~1k) add pipeline_mode=pl.Buffered(1) to these specs and an explicit
    # vmem_limit_bytes so three resident (D, D) weights fit v7x's 64 MiB VMEM.
    # At D=32 this is a few KiB and moot.
    w_spec = pl.BlockSpec((D, D), lambda b: (0, 0))
    b_spec = pl.BlockSpec((1, D), lambda b: (0, 0))
    x_spec = pl.BlockSpec((block_b, N, D), lambda b: (b, 0, 0))

    # Advisory cost estimate so XLA schedules/overlaps this call sensibly.
    itemsize = np.dtype(sim_emb.dtype).itemsize
    cost = pl.CostEstimate(
        flops=b_pad * (6 * N * D * D + 4 * N * N * D),
        transcendentals=b_pad * N * N,
        bytes_accessed=int(itemsize * (2 * b_pad * N * D + 3 * D * D + 3 * D)),
    )

    out = pl.pallas_call(
        graph_reasoning_kernel,
        out_shape=jax.ShapeDtypeStruct((b_pad, N, D), sim_emb.dtype),
        grid_spec=pltpu.PrefetchScalarGridSpec(
            num_scalar_prefetch=0,
            grid=(grid_b,),
            in_specs=[
                x_spec,            # sim_emb block
                w_spec, b_spec,    # query linear
                w_spec, b_spec,    # key linear
                w_spec, b_spec,    # graph linear
            ],
            out_specs=pl.BlockSpec((block_b, N, D), lambda b: (b, 0, 0)),
        ),
        compiler_params=pltpu.CompilerParams(
            dimension_semantics=("parallel",)),
        cost_estimate=cost,
    )(x, wq_t, bq2, wk_t, bk2, wg_t, bg2)

    return out[:B] if b_pad != B else out


def init_linear(key, in_features, out_features):
    # Matches init_weights(): uniform(-r, r), r = sqrt(6/(in+out)), bias = 0.
    r = np.sqrt(6.0) / np.sqrt(in_features + out_features)
    w = jax.random.uniform(key, (out_features, in_features),
                           dtype=jnp.float32, minval=-r, maxval=r)
    b = jnp.zeros((out_features,), dtype=jnp.float32)
    return w, b


if __name__ == "__main__":
    B, N, D = 2, 8, 32   # batch, L+1 graph nodes, sim_dim

    key = jax.random.PRNGKey(0)
    k_x, k_q, k_k, k_g = jax.random.split(key, 4)

    sim_emb = jax.random.normal(k_x, (B, N, D), dtype=jnp.float32)
    wq, bq = init_linear(k_q, D, D)
    wk, bk = init_linear(k_k, D, D)
    wg, bg = init_linear(k_g, D, D)

    out = graph_reasoning(sim_emb, wq, bq, wk, bk, wg, bg)
    jax.block_until_ready(out)

    # Pure-JAX reference for sanity.
    def ref(xx):
        q = xx @ wq.T + bq
        k = xx @ wk.T + bk
        e = jax.nn.softmax(jnp.einsum("bnd,bmd->bnm", q, k), axis=-1)
        sgr = jnp.einsum("bnm,bmd->bnd", e, xx)
        return jax.nn.relu(sgr @ wg.T + bg)

    # approx=True softmax reciprocal -> slightly relaxed tolerance vs exact ref.
    np.testing.assert_allclose(np.asarray(out), np.asarray(ref(sim_emb)),
                               rtol=5e-3, atol=5e-3)

    # Also exercise the multi-batch-per-step + padded-batch path (TB=3, grid=2).
    sim_emb2 = jax.random.normal(jax.random.PRNGKey(1), (5, N, D),
                                 dtype=jnp.float32)
    out2 = graph_reasoning(sim_emb2, wq, bq, wk, bk, wg, bg)
    jax.block_until_ready(out2)
    np.testing.assert_allclose(np.asarray(out2), np.asarray(ref(sim_emb2)),
                               rtol=5e-3, atol=5e-3)

    print("KERNEL_OK")
</pallas_src>

<mosaic_0001>
module attributes {stable_mosaic.version = 11 : i64} {
  func.func @graph_reasoning_kernel(%arg0: i32, %arg1: memref<1x8x32xf32, #tpu.memory_space<vmem>>, %arg2: memref<32x32xf32, #tpu.memory_space<vmem>>, %arg3: memref<1x32xf32, #tpu.memory_space<vmem>>, %arg4: memref<32x32xf32, #tpu.memory_space<vmem>>, %arg5: memref<1x32xf32, #tpu.memory_space<vmem>>, %arg6: memref<32x32xf32, #tpu.memory_space<vmem>>, %arg7: memref<1x32xf32, #tpu.memory_space<vmem>>, %arg8: memref<1x8x32xf32, #tpu.memory_space<vmem>>) attributes {dimension_semantics = [#tpu.dimension_semantics<parallel>], iteration_bounds = array<i64: 2>, scalar_prefetch = 0 : i64, scratch_operands = 0 : i64, tpu.core_type = #tpu.core_type<tc>, window_params = [{transform_indices = @transform_0, window_bounds = array<i64: 1, 8, 32>}, {pipeline_mode = #tpu.pipeline_mode<synchronous>, transform_indices = @transform_1, window_bounds = array<i64: 32, 32>}, {pipeline_mode = #tpu.pipeline_mode<synchronous>, transform_indices = @transform_2, window_bounds = array<i64: 1, 32>}, {pipeline_mode = #tpu.pipeline_mode<synchronous>, transform_indices = @transform_3, window_bounds = array<i64: 32, 32>}, {pipeline_mode = #tpu.pipeline_mode<synchronous>, transform_indices = @transform_4, window_bounds = array<i64: 1, 32>}, {pipeline_mode = #tpu.pipeline_mode<synchronous>, transform_indices = @transform_5, window_bounds = array<i64: 32, 32>}, {pipeline_mode = #tpu.pipeline_mode<synchronous>, transform_indices = @transform_6, window_bounds = array<i64: 1, 32>}, {transform_indices = @transform_7, window_bounds = array<i64: 1, 8, 32>}]} {
    %c0 = arith.constant 0 : index
    %c0_0 = arith.constant 0 : index
    %c0_1 = arith.constant 0 : index
    %0 = vector.load %arg1[%c0, %c0_0, %c0_1] : memref<1x8x32xf32, #tpu.memory_space<vmem>>, vector<1x8x32xf32>
    %1 = vector.shape_cast %0 : vector<1x8x32xf32> to vector<8x32xf32>
    %c0_2 = arith.constant 0 : index
    %c0_3 = arith.constant 0 : index
    %2 = vector.load %arg2[%c0_2, %c0_3] : memref<32x32xf32, #tpu.memory_space<vmem>>, vector<32x32xf32>
    %cst = arith.constant dense<0.000000e+00> : vector<8x32xf32>
    %3 = tpu.matmul %1, %2, %cst {dimension_numbers = #tpu.dot_dimension_numbers<[1], [0], [0], [1], [0, 0, 1, 1], [], []>} : vector<8x32xf32>, vector<32x32xf32>, vector<8x32xf32> -> vector<8x32xf32>
    %c0_4 = arith.constant 0 : index
    %c0_5 = arith.constant 0 : index
    %4 = vector.load %arg3[%c0_4, %c0_5] : memref<1x32xf32, #tpu.memory_space<vmem>>, vector<1x32xf32>
    %5 = vector.broadcast %4 : vector<1x32xf32> to vector<8x32xf32>
    %6 = arith.addf %3, %5 : vector<8x32xf32>
    %c0_6 = arith.constant 0 : index
    %c0_7 = arith.constant 0 : index
    %7 = vector.load %arg4[%c0_6, %c0_7] : memref<32x32xf32, #tpu.memory_space<vmem>>, vector<32x32xf32>
    %cst_8 = arith.constant dense<0.000000e+00> : vector<8x32xf32>
    %8 = tpu.matmul %1, %7, %cst_8 {dimension_numbers = #tpu.dot_dimension_numbers<[1], [0], [0], [1], [0, 0, 1, 1], [], []>} : vector<8x32xf32>, vector<32x32xf32>, vector<8x32xf32> -> vector<8x32xf32>
    %c0_9 = arith.constant 0 : index
    %c0_10 = arith.constant 0 : index
    %9 = vector.load %arg5[%c0_9, %c0_10] : memref<1x32xf32, #tpu.memory_space<vmem>>, vector<1x32xf32>
    %10 = vector.broadcast %9 : vector<1x32xf32> to vector<8x32xf32>
    %11 = arith.addf %8, %10 : vector<8x32xf32>
    %12 = vector.shape_cast %6 : vector<8x32xf32> to vector<1x8x32xf32>
    %13 = vector.shape_cast %11 : vector<8x32xf32> to vector<1x8x32xf32>
    %cst_11 = arith.constant dense<0.000000e+00> : vector<1x8x8xf32>
    %14 = tpu.matmul %12, %13, %cst_11 {dimension_numbers = #tpu.dot_dimension_numbers<[2], [2], [1], [1], [0, 0, 0, 1, 1, 1], [0], [0]>} : vector<1x8x32xf32>, vector<1x8x32xf32>, vector<1x8x8xf32> -> vector<1x8x8xf32>
    %cst_12 = arith.constant dense<0xFF800000> : vector<1x8xf32>
    %15 = vector.multi_reduction <maximumf>, %14, %cst_12 [2] : vector<1x8x8xf32> to vector<1x8xf32>
    %16 = vector.shape_cast %15 : vector<1x8xf32> to vector<1x8x1xf32>
    %17 = vector.broadcast %16 : vector<1x8x1xf32> to vector<1x8x8xf32>
    %18 = arith.subf %14, %17 : vector<1x8x8xf32>
    %19 = math.exp %18 : vector<1x8x8xf32>
    %cst_13 = arith.constant dense<0.000000e+00> : vector<1x8xf32>
    %20 = vector.multi_reduction <add>, %19, %cst_13 [2] : vector<1x8x8xf32> to vector<1x8xf32>
    %21 = vector.shape_cast %20 : vector<1x8xf32> to vector<1x8x1xf32>
    %22 = tpu.reciprocal %21 {approx = true} : vector<1x8x1xf32> -> vector<1x8x1xf32>
    %23 = vector.broadcast %22 : vector<1x8x1xf32> to vector<1x8x8xf32>
    %24 = arith.mulf %19, %23 : vector<1x8x8xf32>
    %cst_14 = arith.constant dense<0.000000e+00> : vector<1x8x32xf32>
    %25 = tpu.matmul %24, %0, %cst_14 {dimension_numbers = #tpu.dot_dimension_numbers<[2], [1], [1], [2], [0, 0, 0, 1, 1, 2], [0], [0]>} : vector<1x8x8xf32>, vector<1x8x32xf32>, vector<1x8x32xf32> -> vector<1x8x32xf32>
    %26 = vector.shape_cast %25 : vector<1x8x32xf32> to vector<8x32xf32>
    %c0_15 = arith.constant 0 : index
    %c0_16 = arith.constant 0 : index
    %27 = vector.load %arg6[%c0_15, %c0_16] : memref<32x32xf32, #tpu.memory_space<vmem>>, vector<32x32xf32>
    %cst_17 = arith.constant dense<0.000000e+00> : vector<8x32xf32>
    %28 = tpu.matmul %26, %27, %cst_17 {dimension_numbers = #tpu.dot_dimension_numbers<[1], [0], [0], [1], [0, 0, 1, 1], [], []>} : vector<8x32xf32>, vector<32x32xf32>, vector<8x32xf32> -> vector<8x32xf32>
    %c0_18 = arith.constant 0 : index
    %c0_19 = arith.constant 0 : index
    %29 = vector.load %arg7[%c0_18, %c0_19] : memref<1x32xf32, #tpu.memory_space<vmem>>, vector<1x32xf32>
    %30 = vector.broadcast %29 : vector<1x32xf32> to vector<8x32xf32>
    %31 = arith.addf %28, %30 : vector<8x32xf32>
    %cst_20 = arith.constant 0.000000e+00 : f32
    %32 = vector.broadcast %cst_20 : f32 to vector<8x32xf32>
    %33 = arith.maximumf %31, %32 : vector<8x32xf32>
    %34 = vector.shape_cast %33 : vector<8x32xf32> to vector<1x8x32xf32>
    %c0_21 = arith.constant 0 : index
    %c0_22 = arith.constant 0 : index
    %c0_23 = arith.constant 0 : index
    %35 = vector.load %arg8[%c0_21, %c0_22, %c0_23] : memref<1x8x32xf32, #tpu.memory_space<vmem>>, vector<1x8x32xf32>
    tpu.vector_store %arg8[%c0_21, %c0_22, %c0_23], %34 {strides = array<i32>} : memref<1x8x32xf32, #tpu.memory_space<vmem>>, vector<1x8x32xf32>,
    return
  }
  func.func @transform_0(%arg0: i32) -> (i32, i32, i32) {
    %c0_i32 = arith.constant 0 : i32
    %c0_i32_0 = arith.constant 0 : i32
    %c0_i32_1 = arith.constant 0 : i32
    return %arg0, %c0_i32, %c0_i32_0 : i32, i32, i32
  }
  func.func @transform_1(%arg0: i32) -> (i32, i32) {
    %c0_i32 = arith.constant 0 : i32
    %c0_i32_0 = arith.constant 0 : i32
    %c0_i32_1 = arith.constant 0 : i32
    return %c0_i32, %c0_i32_0 : i32, i32
  }
  func.func @transform_2(%arg0: i32) -> (i32, i32) {
    %c0_i32 = arith.constant 0 : i32
    %c0_i32_0 = arith.constant 0 : i32
    %c0_i32_1 = arith.constant 0 : i32
    return %c0_i32, %c0_i32_0 : i32, i32
  }
  func.func @transform_3(%arg0: i32) -> (i32, i32) {
    %c0_i32 = arith.constant 0 : i32
    %c0_i32_0 = arith.constant 0 : i32
    %c0_i32_1 = arith.constant 0 : i32
    return %c0_i32, %c0_i32_0 : i32, i32
  }
  func.func @transform_4(%arg0: i32) -> (i32, i32) {
    %c0_i32 = arith.constant 0 : i32
    %c0_i32_0 = arith.constant 0 : i32
    %c0_i32_1 = arith.constant 0 : i32
    return %c0_i32, %c0_i32_0 : i32, i32
  }
  func.func @transform_5(%arg0: i32) -> (i32, i32) {
    %c0_i32 = arith.constant 0 : i32
    %c0_i32_0 = arith.constant 0 : i32
    %c0_i32_1 = arith.constant 0 : i32
    return %c0_i32, %c0_i32_0 : i32, i32
  }
  func.func @transform_6(%arg0: i32) -> (i32, i32) {
    %c0_i32 = arith.constant 0 : i32
    %c0_i32_0 = arith.constant 0 : i32
    %c0_i32_1 = arith.constant 0 : i32
    return %c0_i32, %c0_i32_0 : i32, i32
  }
  func.func @transform_7(%arg0: i32) -> (i32, i32, i32) {
    %c0_i32 = arith.constant 0 : i32
    %c0_i32_0 = arith.constant 0 : i32
    %c0_i32_1 = arith.constant 0 : i32
    return %arg0, %c0_i32, %c0_i32_0 : i32, i32, i32
  }
}

</mosaic_0001>

<llo_original>
// kernel: tpu_custom_call.1
$region0: #{tpu_custom_call.1}
  #allocation0 [shape = 'u32[]', space=smem, size = 0x4, offset = 0x4, fixed_abs, tag = 'smem constant byte address 0x4 - core index']
  #allocation1 [shape = 'u32[144,128]{1,0:T(1,128)}', space=vmem, size = 0x12000, scoped, tag = 'internal scratch']
  %s0 = inlined_call_operand.hbm [shape: f32[2,8,32], index: 0, kind: input, shape index: {}]
  %s1 = inlined_call_operand.hbm [shape: f32[32,32], index: 1, kind: input, shape index: {}]
  %s2 = inlined_call_operand.vmem [shape: f32[1,32], index: 2, kind: input, shape index: {}]
  %s3 = inlined_call_operand.hbm [shape: f32[32,32], index: 3, kind: input, shape index: {}]
  %s4 = inlined_call_operand.vmem [shape: f32[1,32], index: 4, kind: input, shape index: {}]
  %s5 = inlined_call_operand.hbm [shape: f32[32,32], index: 5, kind: input, shape index: {}]
  %s6 = inlined_call_operand.vmem [shape: f32[1,32], index: 6, kind: input, shape index: {}]
  %s7 = inlined_call_operand.hbm [shape: f32[2,8,32], index: 7, kind: output, shape index: {}]
  %s8 = sld [smem:[#allocation0]]
  $region77: #{tpu_custom_call.1} parent=0
    _
  %s10 = ssub.s32 1, %s8
  %s11 = scalar_select 0, %s10, %s8
  $region1: #{tpu_custom_call.1} parent=0
    #allocation2 [shape = 'u8[8192]{0}', space=vmem, size = 0x2000, scoped, tag = 'input window, operand 0']
    #allocation3 [shape = 's32[2]{0}', space=sflag, size = 0x8, scoped, tag = 'scoped memory for tpu_custom_call.1']
    #allocation4 [shape = 's32[2]{0}', space=sflag, size = 0x8, scoped, tag = 'scoped memory for tpu_custom_call.1']
    #allocation5 [shape = 'u8[16384]{0}', space=vmem, size = 0x4000, scoped, tag = 'input window, operand 1, single buffered']
    #allocation6 [shape = 's32[1]{0}', space=sflag, size = 0x4, scoped, tag = 'scoped memory for tpu_custom_call.1']
    #allocation7 [shape = 'u8[16384]{0}', space=vmem, size = 0x4000, scoped, tag = 'input window, operand 3, single buffered']
    #allocation8 [shape = 'u8[16384]{0}', space=vmem, size = 0x4000, scoped, tag = 'input window, operand 5, single buffered']
    #allocation9 [shape = 's32[1]{0}', space=sflag, size = 0x4, scoped, tag = 'scoped memory for tpu_custom_call.1']
    #allocation10 [shape = 'u8[8192]{0}', space=vmem, size = 0x2000, scoped, tag = 'output window, operand 0']
    %12 = vsyncpa [#allocation3], 0
    %s13 = scalar_lea.sflag [#allocation3], 1
    %14 = vsyncpa %s13, 0
    %15 = vsyncpa [#allocation6], 0
    %16 = vsyncpa [#allocation9], 0
    %17 = vsyncpa [#allocation4], 0
    %s18 = scalar_lea.sflag [#allocation4], 1
    %19 = vsyncpa %s18, 0
    loop: start=0, step=1, limit=4
    $region2: #{tpu_custom_call.1} parent=1 // loop_pre_header
      _
    $region3: #{tpu_custom_call.1} parent=1 // loop_header
      %s21 = sphi 0, %s25
      %p22 = scmp.ge.s32.totalorder %s21, 4
      %s31 = sphi 0, %s33
      %s34 = sphi 0, %s31
      %s35 = sphi 0, %s34
      %s51 = sphi 0, %s35
      %s55 = sphi 0, %s55
      %s57 = sphi 0, %s55
      %s58 = sphi 0, %s57
      %s72 = sphi 0, %s58
      %s76 = sphi 0, %s76
      %s78 = sphi 0, %s76
      %s79 = sphi 0, %s78
      %s93 = sphi 0, %s79
      %s97 = sphi 0, %s97
      %s99 = sphi 0, %s97
      %s100 = sphi 0, %s99
      %s114 = sphi 0, %s100
      %s118 = sphi 0, %s118
      %s120 = sphi 0, %s118
      %s121 = sphi 0, %s120
      %s135 = sphi 0, %s121
      %s139 = sphi 0, %s139
      %s141 = sphi 0, %s139
      %s142 = sphi 0, %s141
      %s156 = sphi 0, %s142
      %s160 = sphi 0, %s160
      %s162 = sphi 0, %s160
      %s163 = sphi 0, %s162
      %s177 = sphi 0, %s163
      %s183 = sphi 0, %s185
      %s186 = sphi 0, %s183
      %s187 = sphi 0, %s186
      %s203 = sphi 0, %s187
    $region4: #{tpu_custom_call.1} parent=1 // loop_header_branch
      %24 = sbr.rel (%p22) target = $region8
    $region5: #{tpu_custom_call.1} parent=1 // loop_body
      %s26 = ssub.s32 %s21, 1
      %s27 = ssub.s32 %s21, 2
      %s28 = sadd.s32 %s21, 1
      %s29 = ssub.s32 %s21, %s28
      %p30 = scmp.eq.s32.totalorder %s29, 0
      %s32 = sadd.s32 %s31, 1
      %s33 = scalar_select %p30, %s31, %s32
      %p36 = pneg %p30
      %p37 = scmp.eq.s32.totalorder %s21, 1
      %p38 = por %p36, %p37
      %p39 = scmp.ne.s32.totalorder %s31, %s34
      %p40 = scmp.eq.s32.totalorder %s21, 0
      %p41 = por %p39, %p40
      %p42 = scmp.ne.s32.totalorder %s31, %s34
      %p43 = scmp.eq.s32.totalorder %s26, 1
      %p44 = por %p42, %p43
      %p45 = scmp.ne.s32.totalorder %s34, %s35
      %p46 = scmp.eq.s32.totalorder %s26, 0
      %p47 = por %p45, %p46
      %p48 = scmp.ne.s32.totalorder %s34, %s35
      %p49 = scmp.eq.s32.totalorder %s27, 1
      %p50 = por %p48, %p49
      %p52 = scmp.ne.s32.totalorder %s35, %s51
      %p53 = scmp.eq.s32.totalorder %s27, 0
      %p54 = por %p52, %p53
      %s56 = sadd.s32 %s55, 1
      %p59 = scmp.eq.s32.totalorder %s21, 1
      %p60 = scmp.ne.s32.totalorder %s55, %s57
      %p61 = scmp.eq.s32.totalorder %s21, 0
      %p62 = por %p60, %p61
      %p63 = scmp.ne.s32.totalorder %s55, %s57
      %p64 = scmp.eq.s32.totalorder %s26, 1
      %p65 = por %p63, %p64
      %p66 = scmp.ne.s32.totalorder %s57, %s58
      %p67 = scmp.eq.s32.totalorder %s26, 0
      %p68 = por %p66, %p67
      %p69 = scmp.ne.s32.totalorder %s57, %s58
      %p70 = scmp.eq.s32.totalorder %s27, 1
      %p71 = por %p69, %p70
      %p73 = scmp.ne.s32.totalorder %s58, %s72
      %p74 = scmp.eq.s32.totalorder %s27, 0
      %p75 = por %p73, %p74
      %s77 = sadd.s32 %s76, 1
      %p80 = scmp.eq.s32.totalorder %s21, 1
      %p81 = scmp.ne.s32.totalorder %s76, %s78
      %p82 = scmp.eq.s32.totalorder %s21, 0
      %p83 = por %p81, %p82
      %p84 = scmp.ne.s32.totalorder %s76, %s78
      %p85 = scmp.eq.s32.totalorder %s26, 1
      %p86 = por %p84, %p85
      %p87 = scmp.ne.s32.totalorder %s78, %s79
      %p88 = scmp.eq.s32.totalorder %s26, 0
      %p89 = por %p87, %p88
      %p90 = scmp.ne.s32.totalorder %s78, %s79
      %p91 = scmp.eq.s32.totalorder %s27, 1
      %p92 = por %p90, %p91
      %p94 = scmp.ne.s32.totalorder %s79, %s93
      %p95 = scmp.eq.s32.totalorder %s27, 0
      %p96 = por %p94, %p95
      %s98 = sadd.s32 %s97, 1
      %p101 = scmp.eq.s32.totalorder %s21, 1
      %p102 = scmp.ne.s32.totalorder %s97, %s99
      %p103 = scmp.eq.s32.totalorder %s21, 0
      %p104 = por %p102, %p103
      %p105 = scmp.ne.s32.totalorder %s97, %s99
      %p106 = scmp.eq.s32.totalorder %s26, 1
      %p107 = por %p105, %p106
      %p108 = scmp.ne.s32.totalorder %s99, %s100
      %p109 = scmp.eq.s32.totalorder %s26, 0
      %p110 = por %p108, %p109
      %p111 = scmp.ne.s32.totalorder %s99, %s100
      %p112 = scmp.eq.s32.totalorder %s27, 1
      %p113 = por %p111, %p112
      %p115 = scmp.ne.s32.totalorder %s100, %s114
      %p116 = scmp.eq.s32.totalorder %s27, 0
      %p117 = por %p115, %p116
      %s119 = sadd.s32 %s118, 1
      %p122 = scmp.eq.s32.totalorder %s21, 1
      %p123 = scmp.ne.s32.totalorder %s118, %s120
      %p124 = scmp.eq.s32.totalorder %s21, 0
      %p125 = por %p123, %p124
      %p126 = scmp.ne.s32.totalorder %s118, %s120
      %p127 = scmp.eq.s32.totalorder %s26, 1
      %p128 = por %p126, %p127
      %p129 = scmp.ne.s32.totalorder %s120, %s121
      %p130 = scmp.eq.s32.totalorder %s26, 0
      %p131 = por %p129, %p130
      %p132 = scmp.ne.s32.totalorder %s120, %s121
      %p133 = scmp.eq.s32.totalorder %s27, 1
      %p134 = por %p132, %p133
      %p136 = scmp.ne.s32.totalorder %s121, %s135
      %p137 = scmp.eq.s32.totalorder %s27, 0
      %p138 = por %p136, %p137
      %s140 = sadd.s32 %s139, 1
      %p143 = scmp.eq.s32.totalorder %s21, 1
      %p144 = scmp.ne.s32.totalorder %s139, %s141
      %p145 = scmp.eq.s32.totalorder %s21, 0
      %p146 = por %p144, %p145
      %p147 = scmp.ne.s32.totalorder %s139, %s141
      %p148 = scmp.eq.s32.totalorder %s26, 1
      %p149 = por %p147, %p148
      %p150 = scmp.ne.s32.totalorder %s141, %s142
      %p151 = scmp.eq.s32.totalorder %s26, 0
      %p152 = por %p150, %p151
      %p153 = scmp.ne.s32.totalorder %s141, %s142
      %p154 = scmp.eq.s32.totalorder %s27, 1
      %p155 = por %p153, %p154
      %p157 = scmp.ne.s32.totalorder %s142, %s156
      %p158 = scmp.eq.s32.totalorder %s27, 0
      %p159 = por %p157, %p158
      %s161 = sadd.s32 %s160, 1
      %p164 = scmp.eq.s32.totalorder %s21, 1
      %p165 = scmp.ne.s32.totalorder %s160, %s162
      %p166 = scmp.eq.s32.totalorder %s21, 0
      %p167 = por %p165, %p166
      %p168 = scmp.ne.s32.totalorder %s160, %s162
      %p169 = scmp.eq.s32.totalorder %s26, 1
      %p170 = por %p168, %p169
      %p171 = scmp.ne.s32.totalorder %s162, %s163
      %p172 = scmp.eq.s32.totalorder %s26, 0
      %p173 = por %p171, %p172
      %p174 = scmp.ne.s32.totalorder %s162, %s163
      %p175 = scmp.eq.s32.totalorder %s27, 1
      %p176 = por %p174, %p175
      %p178 = scmp.ne.s32.totalorder %s163, %s177
      %p179 = scmp.eq.s32.totalorder %s27, 0
      %p180 = por %p178, %p179
      %s181 = ssub.s32 %s21, %s28
      %p182 = scmp.eq.s32.totalorder %s181, 0
      %s184 = sadd.s32 %s183, 1
      %s185 = scalar_select %p182, %s183, %s184
      %p188 = pneg %p182
      %p189 = scmp.eq.s32.totalorder %s21, 1
      %p190 = por %p188, %p189
      %p191 = scmp.ne.s32.totalorder %s183, %s186
      %p192 = scmp.eq.s32.totalorder %s21, 0
      %p193 = por %p191, %p192
      %p194 = scmp.ne.s32.totalorder %s183, %s186
      %p195 = scmp.eq.s32.totalorder %s26, 1
      %p196 = por %p194, %p195
      %p197 = scmp.ne.s32.totalorder %s186, %s187
      %p198 = scmp.eq.s32.totalorder %s26, 0
      %p199 = por %p197, %p198
      %p200 = scmp.ne.s32.totalorder %s186, %s187
      %p201 = scmp.eq.s32.totalorder %s27, 1
      %p202 = por %p200, %p201
      %p204 = scmp.ne.s32.totalorder %s187, %s203
      %p205 = scmp.eq.s32.totalorder %s27, 0
      %p206 = por %p204, %p205
      %p207 = scmp.le.s32.totalorder 1, %s21
      %p208 = scmp.lt.s32.totalorder %s21, 3
      %p209 = pnand %p207, %p208
      %p210 = pneg %p209
      // Predicated region
      $region9: #{tpu_custom_call.1} parent=5 // pred_check
        _
      $region10: #{tpu_custom_call.1} parent=5 // pred_check_branch
        %212 = sbr.rel (%p209) target = $region12
      $region11: #{tpu_custom_call.1} parent=5 // pred_region
        %s213 = ssub.s32 %s21, 1
        // Predicated region
        $region13: #{tpu_custom_call.1} parent=11 // pred_check
          %p214 = pneg %p68
        $region14: #{tpu_custom_call.1} parent=11 // pred_check_branch
          %216 = sbr.rel (%p214) target = $region16
        $region15: #{tpu_custom_call.1} parent=11 // pred_region
          %s218 = ssub.s32 512, 512
          %219 = vsyncadd [#allocation6], %s218
          %s220 = sshll.u32 [#allocation5], 4
          %s221 = int_to_ptr.vmem [resolvable:$true] %s220
          %226 = dma.hbm_to_vmem [thread:$0]  %s1, 512, %s221, [#allocation6], 128, 128, 8
        $region16: #{tpu_custom_call.1} parent=11 // pred_fallthru
          _
        // Predicated region
        $region17: #{tpu_custom_call.1} parent=11 // pred_check
          %p227 = pneg %p89
        $region18: #{tpu_custom_call.1} parent=11 // pred_check_branch
          %229 = sbr.rel (%p227) target = $region20
        $region19: #{tpu_custom_call.1} parent=11 // pred_region
          _
        $region20: #{tpu_custom_call.1} parent=11 // pred_fallthru
          _
        // Predicated region
        $region21: #{tpu_custom_call.1} parent=11 // pred_check
          %p230 = pneg %p110
        $region22: #{tpu_custom_call.1} parent=11 // pred_check_branch
          %232 = sbr.rel (%p230) target = $region24
        $region23: #{tpu_custom_call.1} parent=11 // pred_region
          %s234 = ssub.s32 512, 512
          %235 = vsyncadd [#allocation6], %s234
          %s236 = sshll.u32 [#allocation7], 4
          %s237 = int_to_ptr.vmem [resolvable:$true] %s236
          %242 = dma.hbm_to_vmem [thread:$0]  %s3, 512, %s237, [#allocation6], 128, 128, 8
        $region24: #{tpu_custom_call.1} parent=11 // pred_fallthru
          _
        // Predicated region
        $region25: #{tpu_custom_call.1} parent=11 // pred_check
          %p243 = pneg %p131
        $region26: #{tpu_custom_call.1} parent=11 // pred_check_branch
          %245 = sbr.rel (%p243) target = $region28
        $region27: #{tpu_custom_call.1} parent=11 // pred_region
          _
        $region28: #{tpu_custom_call.1} parent=11 // pred_fallthru
          _
        // Predicated region
        $region29: #{tpu_custom_call.1} parent=11 // pred_check
          %p246 = pneg %p152
        $region30: #{tpu_custom_call.1} parent=11 // pred_check_branch
          %248 = sbr.rel (%p246) target = $region32
        $region31: #{tpu_custom_call.1} parent=11 // pred_region
          %s250 = ssub.s32 512, 512
          %251 = vsyncadd [#allocation9], %s250
          %s252 = sshll.u32 [#allocation8], 4
          %s253 = int_to_ptr.vmem [resolvable:$true] %s252
          %258 = dma.hbm_to_vmem [thread:$0]  %s5, 512, %s253, [#allocation9], 128, 128, 8
        $region32: #{tpu_custom_call.1} parent=11 // pred_fallthru
          _
        // Predicated region
        $region33: #{tpu_custom_call.1} parent=11 // pred_check
          %p259 = pneg %p173
        $region34: #{tpu_custom_call.1} parent=11 // pred_check_branch
          %261 = sbr.rel (%p259) target = $region36
        $region35: #{tpu_custom_call.1} parent=11 // pred_region
          _
        $region36: #{tpu_custom_call.1} parent=11 // pred_fallthru
          _
      $region12: #{tpu_custom_call.1} parent=5 // pred_fallthru
        _
      %p262 = scmp.lt.s32.totalorder %s21, 2
      // Predicated region
      $region37: #{tpu_custom_call.1} parent=5 // pred_check
        %p263 = pneg %p262
      $region38: #{tpu_custom_call.1} parent=5 // pred_check_branch
        %265 = sbr.rel (%p263) target = $region40
      $region39: #{tpu_custom_call.1} parent=5 // pred_region
        // Predicated region
        $region41: #{tpu_custom_call.1} parent=39 // pred_check
          %p266 = pneg %p41
        $region42: #{tpu_custom_call.1} parent=39 // pred_check_branch
          %268 = sbr.rel (%p266) target = $region44
        $region43: #{tpu_custom_call.1} parent=39 // pred_region
          %s269 = sand.u32 %s31, 1
          %s270 = scalar_lea.sflag [#allocation3], %s269
          %s271 = sand.u32 %s31, 1
          %s272 = smul.addr %s271, 8
          %s273 = scalar_lea.vmem [#allocation2], %s272
          %s275 = ssub.s32 128, 128
          %276 = vsyncadd %s270, %s275
          %s277 = smul.addr %s21, 128
          %s278 = scalar_lea.hbm %s0, %s277
          %s280 = sshll.u32 %s273, 4
          %s281 = int_to_ptr.vmem [resolvable:$true] %s280
          %283 = dma.hbm_to_vmem [thread:$0]  %s278, 128, %s281, %s270
        $region44: #{tpu_custom_call.1} parent=39 // pred_fallthru
          _
      $region40: #{tpu_custom_call.1} parent=5 // pred_fallthru
        _
      %p284 = scmp.le.s32.totalorder 1, %s21
      %p285 = scmp.lt.s32.totalorder %s21, 3
      %p286 = pnand %p284, %p285
      %p287 = pneg %p286
      // Predicated region
      $region45: #{tpu_custom_call.1} parent=5 // pred_check
        _
      $region46: #{tpu_custom_call.1} parent=5 // pred_check_branch
        %289 = sbr.rel (%p286) target = $region48
      $region47: #{tpu_custom_call.1} parent=5 // pred_region
        %s290 = ssub.s32 %s21, 1
        %s291 = sand.u32 %s34, 1
        %s292 = scalar_lea.sflag [#allocation3], %s291
        %s293 = sand.u32 %s34, 1
        %s294 = smul.addr %s293, 8
        %s295 = scalar_lea.vmem [#allocation2], %s294
        // Predicated region
        $region49: #{tpu_custom_call.1} parent=47 // pred_check
          %p296 = pneg %p47
        $region50: #{tpu_custom_call.1} parent=47 // pred_check_branch
          %298 = sbr.rel (%p296) target = $region52
        $region51: #{tpu_custom_call.1} parent=47 // pred_region
          %299 = dma.done %s292, 128
        $region52: #{tpu_custom_call.1} parent=47 // pred_fallthru
          _
        // Predicated region
        $region53: #{tpu_custom_call.1} parent=47 // pred_check
          %p300 = pneg %p68
        $region54: #{tpu_custom_call.1} parent=47 // pred_check_branch
          %302 = sbr.rel (%p300) target = $region56
        $region55: #{tpu_custom_call.1} parent=47 // pred_region
          %303 = dma.done [#allocation6], 512
        $region56: #{tpu_custom_call.1} parent=47 // pred_fallthru
          _
        // Predicated region
        $region57: #{tpu_custom_call.1} parent=47 // pred_check
          %p304 = pneg %p110
        $region58: #{tpu_custom_call.1} parent=47 // pred_check_branch
          %306 = sbr.rel (%p304) target = $region60
        $region59: #{tpu_custom_call.1} parent=47 // pred_region
          %307 = dma.done [#allocation6], 512
        $region60: #{tpu_custom_call.1} parent=47 // pred_fallthru
          _
        // Predicated region
        $region61: #{tpu_custom_call.1} parent=47 // pred_check
          %p308 = pneg %p152
        $region62: #{tpu_custom_call.1} parent=47 // pred_check_branch
          %310 = sbr.rel (%p308) target = $region64
        $region63: #{tpu_custom_call.1} parent=47 // pred_region
          %311 = dma.done [#allocation9], 512
        $region64: #{tpu_custom_call.1} parent=47 // pred_fallthru
          _
        %s312 = sand.u32 %s34, 1
        %s313 = scalar_lea.sflag [#allocation3], %s312
        %s314 = sand.u32 %s34, 1
        %s315 = smul.addr %s314, 8
        %s316 = scalar_lea.vmem [#allocation2], %s315
        %p317 = pneg %p47
        %p318 = pneg %p44
        %p319 = pneg %p68
        %p320 = pneg %p65
        %p321 = pneg %p89
        %p322 = pneg %p86
        %p323 = pneg %p110
        %p324 = pneg %p107
        %p325 = pneg %p131
        %p326 = pneg %p128
        %p327 = pneg %p152
        %p328 = pneg %p149
        %p329 = pneg %p173
        %p330 = pneg %p170
        %p331 = pneg %p199
        %p332 = pneg %p196
        %s333 = sand.u32 %s186, 1
        %s334 = scalar_lea.sflag [#allocation4], %s333
        %s335 = sand.u32 %s186, 1
        %s336 = smul.addr %s335, 8
        %s337 = scalar_lea.vmem [#allocation10], %s336
        %v338 = vld [vmem:[%s295] sm:$0xff]
        %v339 = vld [vmem:[#allocation5] sm:$0xff]
        %v340 = vld [vmem:[#allocation5 + $0x8] sm:$0xff]
        %v341 = vld [vmem:[#allocation5 + $0x10] sm:$0xff]
        %v342 = vld [vmem:[#allocation5 + $0x18] sm:$0xff]
        %v343 = vld [vmem:[%s2] sm:$0x1]
        %v345 = vlaneseq
        %v346 = vshrl.u32 %v345, 7
        %v347 = vsub.s32 0, %v346
        %v348 = vrot.slane %v343, %v347
        %vm350 = vcmask 261120
        %v352 = vsel %vm350, %v338, 0
        %354 = vmatprep.subr.mxu0 0.0
        %355 = vmatpush1.msra.mxu0 %v339
        %356 = vmatprep.subr.mxu0 0.0
        %357 = vmatpush1.msra.mxu0 %v340
        %358 = vmatprep.subr.mxu0 0.0
        %359 = vmatpush1.msra.mxu0 %v341
        %360 = vmatprep.subr.mxu0 0.0
        %361 = vmatpush1.msra.mxu0 %v342
        %362 = vmatprep.subr.mxu0 0.0
        %363 = vmatpush1.msra.mxu0 0.0
        %364 = vmatprep.subr.mxu0 0.0
        %365 = vmatpush1.msra.mxu0 0.0
        %366 = vmatprep.subr.mxu0 0.0
        %367 = vmatpush1.msra.mxu0 0.0
        %368 = vmatprep.subr.mxu0 0.0
        %369 = vmatpush1.msra.mxu0 0.0
        %370 = vmatprep.subr.mxu0 0.0
        %371 = vmatpush1.msra.mxu0 0.0
        %372 = vmatprep.subr.mxu0 0.0
        %373 = vmatpush1.msra.mxu0 0.0
        %374 = vmatprep.subr.mxu0 0.0
        %375 = vmatpush1.msra.mxu0 0.0
        %376 = vmatprep.subr.mxu0 0.0
        %377 = vmatpush1.msra.mxu0 0.0
        %378 = vmatprep.subr.mxu0 0.0
        %379 = vmatpush1.msra.mxu0 0.0
        %380 = vmatprep.subr.mxu0 0.0
        %381 = vmatpush1.msra.mxu0 0.0
        %382 = vmatprep.subr.mxu0 0.0
        %383 = vmatpush1.msra.mxu0 0.0
        %384 = vmatprep.subr.mxu0 0.0
        %385 = vmatpush1.msra.mxu0 0.0
        %386 = vmatprep.subr.mxu0 0.0
        %387 = vmatpush1.msra.mxu0 0.0
        %388 = vmatprep.subr.mxu0 0.0
        %389 = vmatpush1.msra.mxu0 0.0
        %390 = vmatprep.subr.mxu0 0.0
        %391 = vmatpush1.msra.mxu0 0.0
        %392 = vmatprep.subr.mxu0 0.0
        %393 = vmatpush1.msra.mxu0 0.0
        %394 = vmatprep.subr.mxu0 0.0
        %395 = vmatpush1.msra.mxu0 0.0
        %396 = vmatprep.subr.mxu0 0.0
        %397 = vmatpush1.msra.mxu0 0.0
        %398 = vmatprep.subr.mxu0 0.0
        %399 = vmatpush1.msra.mxu0 0.0
        %400 = vmatprep.subr.mxu0 0.0
        %401 = vmatpush1.msra.mxu0 0.0
        %402 = vmatprep.subr.mxu0 0.0
        %403 = vmatpush1.msra.mxu0 0.0
        %404 = vmatprep.subr.mxu0 0.0
        %405 = vmatpush1.msra.mxu0 0.0
        %406 = vmatprep.subr.mxu0 0.0
        %407 = vmatpush1.msra.mxu0 0.0
        %408 = vmatprep.subr.mxu0 0.0
        %409 = vmatpush1.msra.mxu0 0.0
        %410 = vmatprep.subr.mxu0 0.0
        %411 = vmatpush1.msra.mxu0 0.0
        %412 = vmatprep.subr.mxu0 0.0
        %413 = vmatpush1.msra.mxu0 0.0
        %414 = vmatprep.subr.mxu0 0.0
        %415 = vmatpush1.msra.mxu0 0.0
        %416 = vmatprep.subr.mxu0 0.0
        %417 = vmatpush1.msra.mxu0 0.0
        %418 = vmatprep.mubr.f32.mxu0 0.0
        %419 = vmatmul.mubr.f32.gmra.mrb[0].mxu0 %v352
        %v420 = vpop.f32.mrb[0].mxu0
        %v421 = vadd.f32 %v348, %v420
        %v422 = vpop.f32.mrb[0].mxu0
        %423 = vdwg.mxu0
        %v424 = vld [vmem:[#allocation7] sm:$0xff]
        %v425 = vld [vmem:[#allocation7 + $0x8] sm:$0xff]
        %v426 = vld [vmem:[#allocation7 + $0x10] sm:$0xff]
        %v427 = vld [vmem:[#allocation7 + $0x18] sm:$0xff]
        %v428 = vld [vmem:[%s4] sm:$0x1]
        %v430 = vlaneseq
        %v431 = vshrl.u32 %v430, 7
        %v432 = vsub.s32 0, %v431
        %v433 = vrot.slane %v428, %v432
        %435 = vmatprep.subr.mxu0 0.0
        %436 = vmatpush1.msra.mxu0 %v424
        %437 = vmatprep.subr.mxu0 0.0
        %438 = vmatpush1.msra.mxu0 %v425
        %439 = vmatprep.subr.mxu0 0.0
        %440 = vmatpush1.msra.mxu0 %v426
        %441 = vmatprep.subr.mxu0 0.0
        %442 = vmatpush1.msra.mxu0 %v427
        %443 = vmatprep.subr.mxu0 0.0
        %444 = vmatpush1.msra.mxu0 0.0
        %445 = vmatprep.subr.mxu0 0.0
        %446 = vmatpush1.msra.mxu0 0.0
        %447 = vmatprep.subr.mxu0 0.0
        %448 = vmatpush1.msra.mxu0 0.0
        %449 = vmatprep.subr.mxu0 0.0
        %450 = vmatpush1.msra.mxu0 0.0
        %451 = vmatprep.subr.mxu0 0.0
        %452 = vmatpush1.msra.mxu0 0.0
        %453 = vmatprep.subr.mxu0 0.0
        %454 = vmatpush1.msra.mxu0 0.0
        %455 = vmatprep.subr.mxu0 0.0
        %456 = vmatpush1.msra.mxu0 0.0
        %457 = vmatprep.subr.mxu0 0.0
        %458 = vmatpush1.msra.mxu0 0.0
        %459 = vmatprep.subr.mxu0 0.0
        %460 = vmatpush1.msra.mxu0 0.0
        %461 = vmatprep.subr.mxu0 0.0
        %462 = vmatpush1.msra.mxu0 0.0
        %463 = vmatprep.subr.mxu0 0.0
        %464 = vmatpush1.msra.mxu0 0.0
        %465 = vmatprep.subr.mxu0 0.0
        %466 = vmatpush1.msra.mxu0 0.0
        %467 = vmatprep.subr.mxu0 0.0
        %468 = vmatpush1.msra.mxu0 0.0
        %469 = vmatprep.subr.mxu0 0.0
        %470 = vmatpush1.msra.mxu0 0.0
        %471 = vmatprep.subr.mxu0 0.0
        %472 = vmatpush1.msra.mxu0 0.0
        %473 = vmatprep.subr.mxu0 0.0
        %474 = vmatpush1.msra.mxu0 0.0
        %475 = vmatprep.subr.mxu0 0.0
        %476 = vmatpush1.msra.mxu0 0.0
        %477 = vmatprep.subr.mxu0 0.0
        %478 = vmatpush1.msra.mxu0 0.0
        %479 = vmatprep.subr.mxu0 0.0
        %480 = vmatpush1.msra.mxu0 0.0
        %481 = vmatprep.subr.mxu0 0.0
        %482 = vmatpush1.msra.mxu0 0.0
        %483 = vmatprep.subr.mxu0 0.0
        %484 = vmatpush1.msra.mxu0 0.0
        %485 = vmatprep.subr.mxu0 0.0
        %486 = vmatpush1.msra.mxu0 0.0
        %487 = vmatprep.subr.mxu0 0.0
        %488 = vmatpush1.msra.mxu0 0.0
        %489 = vmatprep.subr.mxu0 0.0
        %490 = vmatpush1.msra.mxu0 0.0
        %491 = vmatprep.subr.mxu0 0.0
        %492 = vmatpush1.msra.mxu0 0.0
        %493 = vmatprep.subr.mxu0 0.0
        %494 = vmatpush1.msra.mxu0 0.0
        %495 = vmatprep.subr.mxu0 0.0
        %496 = vmatpush1.msra.mxu0 0.0
        %497 = vmatprep.subr.mxu0 0.0
        %498 = vmatpush1.msra.mxu0 0.0
        %499 = vmatprep.mubr.f32.mxu0 0.0
        %500 = vmatmul.mubr.f32.gmra.mrb[0].mxu0 %v352
        %v501 = vpop.f32.mrb[0].mxu0
        %v502 = vadd.f32 %v433, %v501
        %v503 = vpop.f32.mrb[0].mxu0
        %504 = vdwg.mxu0
        %v506 = vsel %vm350, %v421, 0
        %v509 = vsel %vm350, %v502, 0
        %511 = vmatprep.subr.mxu0 0.0
        %512 = vmatpush1.xpose.msra.mxu0 %v509
        %513 = vmatprep.subr.mxu0 0.0
        %514 = vmatpush1.xpose.msra.mxu0 0.0
        %515 = vmatprep.subr.mxu0 0.0
        %516 = vmatpush1.xpose.msra.mxu0 0.0
        %517 = vmatprep.subr.mxu0 0.0
        %518 = vmatpush1.xpose.msra.mxu0 0.0
        %519 = vmatprep.subr.mxu0 0.0
        %520 = vmatpush1.xpose.msra.mxu0 0.0
        %521 = vmatprep.subr.mxu0 0.0
        %522 = vmatpush1.xpose.msra.mxu0 0.0
        %523 = vmatprep.subr.mxu0 0.0
        %524 = vmatpush1.xpose.msra.mxu0 0.0
        %525 = vmatprep.subr.mxu0 0.0
        %526 = vmatpush1.xpose.msra.mxu0 0.0
        %527 = vmatprep.subr.mxu0 0.0
        %528 = vmatpush1.xpose.msra.mxu0 0.0
        %529 = vmatprep.subr.mxu0 0.0
        %530 = vmatpush1.xpose.msra.mxu0 0.0
        %531 = vmatprep.subr.mxu0 0.0
        %532 = vmatpush1.xpose.msra.mxu0 0.0
        %533 = vmatprep.subr.mxu0 0.0
        %534 = vmatpush1.xpose.msra.mxu0 0.0
        %535 = vmatprep.subr.mxu0 0.0
        %536 = vmatpush1.xpose.msra.mxu0 0.0
        %537 = vmatprep.subr.mxu0 0.0
        %538 = vmatpush1.xpose.msra.mxu0 0.0
        %539 = vmatprep.subr.mxu0 0.0
        %540 = vmatpush1.xpose.msra.mxu0 0.0
        %541 = vmatprep.subr.mxu0 0.0
        %542 = vmatpush1.xpose.msra.mxu0 0.0
        %543 = vmatprep.subr.mxu0 0.0
        %544 = vmatpush1.xpose.msra.mxu0 0.0
        %545 = vmatprep.subr.mxu0 0.0
        %546 = vmatpush1.xpose.msra.mxu0 0.0
        %547 = vmatprep.subr.mxu0 0.0
        %548 = vmatpush1.xpose.msra.mxu0 0.0
        %549 = vmatprep.subr.mxu0 0.0
        %550 = vmatpush1.xpose.msra.mxu0 0.0
        %551 = vmatprep.subr.mxu0 0.0
        %552 = vmatpush1.xpose.msra.mxu0 0.0
        %553 = vmatprep.subr.mxu0 0.0
        %554 = vmatpush1.xpose.msra.mxu0 0.0
        %555 = vmatprep.subr.mxu0 0.0
        %556 = vmatpush1.xpose.msra.mxu0 0.0
        %557 = vmatprep.subr.mxu0 0.0
        %558 = vmatpush1.xpose.msra.mxu0 0.0
        %559 = vmatprep.subr.mxu0 0.0
        %560 = vmatpush1.xpose.msra.mxu0 0.0
        %561 = vmatprep.subr.mxu0 0.0
        %562 = vmatpush1.xpose.msra.mxu0 0.0
        %563 = vmatprep.subr.mxu0 0.0
        %564 = vmatpush1.xpose.msra.mxu0 0.0
        %565 = vmatprep.subr.mxu0 0.0
        %566 = vmatpush1.xpose.msra.mxu0 0.0
        %567 = vmatprep.subr.mxu0 0.0
        %568 = vmatpush1.xpose.msra.mxu0 0.0
        %569 = vmatprep.subr.mxu0 0.0
        %570 = vmatpush1.xpose.msra.mxu0 0.0
        %571 = vmatprep.subr.mxu0 0.0
        %572 = vmatpush1.xpose.msra.mxu0 0.0
        %573 = vmatprep.subr.mxu0 0.0
        %574 = vmatpush1.xpose.msra.mxu0 0.0
        %575 = vmatprep.mubr.f32.mxu0 0.0
        %576 = vmatmul.mubr.f32.gmra.mrb[0].mxu0 %v506
        %v577 = vpop.f32.mrb[0].mxu0
        %v578 = vadd.f32 0.0, %v577
        %v579 = vpop.f32.mrb[0].mxu0
        %580 = vdwg.mxu0
        %vm581 = vcmask 64512
        %v582 = vsel %vm581, %v578, -inf
        %583 = vmax.xlane.f32.xlu0 %v582
        %v584 = vpop.xlane.xlu0 %583
        %v585 = vsub.f32 %v578, %v584
        %v586 = vmul.f32 %v585, 1.442695
        %v587 = vpow.pop %v586
        %v588 = vsel %vm581, %v587, 0.0
        %589 = vadd.xlane.f32.xlu0 %v588
        %v590 = vpop.xlane.xlu0 %589
        %v591 = vrcp.pop %v590
        %v592 = vmul.f32 %v587, %v591
        %v594 = vsel %vm581, %v592, 0
        %596 = vmatprep.subr.mxu0 0.0
        %597 = vmatpush1.msra.mxu0 %v338
        %598 = vmatprep.subr.mxu0 0.0
        %599 = vmatpush1.msra.mxu0 0.0
        %600 = vmatprep.subr.mxu0 0.0
        %601 = vmatpush1.msra.mxu0 0.0
        %602 = vmatprep.subr.mxu0 0.0
        %603 = vmatpush1.msra.mxu0 0.0
        %604 = vmatprep.subr.mxu0 0.0
        %605 = vmatpush1.msra.mxu0 0.0
        %606 = vmatprep.subr.mxu0 0.0
        %607 = vmatpush1.msra.mxu0 0.0
        %608 = vmatprep.subr.mxu0 0.0
        %609 = vmatpush1.msra.mxu0 0.0
        %610 = vmatprep.subr.mxu0 0.0
        %611 = vmatpush1.msra.mxu0 0.0
        %612 = vmatprep.subr.mxu0 0.0
        %613 = vmatpush1.msra.mxu0 0.0
        %614 = vmatprep.subr.mxu0 0.0
        %615 = vmatpush1.msra.mxu0 0.0
        %616 = vmatprep.subr.mxu0 0.0
        %617 = vmatpush1.msra.mxu0 0.0
        %618 = vmatprep.subr.mxu0 0.0
        %619 = vmatpush1.msra.mxu0 0.0
        %620 = vmatprep.subr.mxu0 0.0
        %621 = vmatpush1.msra.mxu0 0.0
        %622 = vmatprep.subr.mxu0 0.0
        %623 = vmatpush1.msra.mxu0 0.0
        %624 = vmatprep.subr.mxu0 0.0
        %625 = vmatpush1.msra.mxu0 0.0
        %626 = vmatprep.subr.mxu0 0.0
        %627 = vmatpush1.msra.mxu0 0.0
        %628 = vmatprep.subr.mxu0 0.0
        %629 = vmatpush1.msra.mxu0 0.0
        %630 = vmatprep.subr.mxu0 0.0
        %631 = vmatpush1.msra.mxu0 0.0
        %632 = vmatprep.subr.mxu0 0.0
        %633 = vmatpush1.msra.mxu0 0.0
        %634 = vmatprep.subr.mxu0 0.0
        %635 = vmatpush1.msra.mxu0 0.0
        %636 = vmatprep.subr.mxu0 0.0
        %637 = vmatpush1.msra.mxu0 0.0
        %638 = vmatprep.subr.mxu0 0.0
        %639 = vmatpush1.msra.mxu0 0.0
        %640 = vmatprep.subr.mxu0 0.0
        %641 = vmatpush1.msra.mxu0 0.0
        %642 = vmatprep.subr.mxu0 0.0
        %643 = vmatpush1.msra.mxu0 0.0
        %644 = vmatprep.subr.mxu0 0.0
        %645 = vmatpush1.msra.mxu0 0.0
        %646 = vmatprep.subr.mxu0 0.0
        %647 = vmatpush1.msra.mxu0 0.0
        %648 = vmatprep.subr.mxu0 0.0
        %649 = vmatpush1.msra.mxu0 0.0
        %650 = vmatprep.subr.mxu0 0.0
        %651 = vmatpush1.msra.mxu0 0.0
        %652 = vmatprep.subr.mxu0 0.0
        %653 = vmatpush1.msra.mxu0 0.0
        %654 = vmatprep.subr.mxu0 0.0
        %655 = vmatpush1.msra.mxu0 0.0
        %656 = vmatprep.subr.mxu0 0.0
        %657 = vmatpush1.msra.mxu0 0.0
        %658 = vmatprep.subr.mxu0 0.0
        %659 = vmatpush1.msra.mxu0 0.0
        %660 = vmatprep.mubr.f32.mxu0 0.0
        %661 = vmatmul.mubr.f32.gmra.mrb[0].mxu0 %v594
        %v662 = vpop.f32.mrb[0].mxu0
        %v663 = vadd.f32 0.0, %v662
        %v664 = vpop.f32.mrb[0].mxu0
        %665 = vdwg.mxu0
        %v666 = vld [vmem:[#allocation8] sm:$0xff]
        %v667 = vld [vmem:[#allocation8 + $0x8] sm:$0xff]
        %v668 = vld [vmem:[#allocation8 + $0x10] sm:$0xff]
        %v669 = vld [vmem:[#allocation8 + $0x18] sm:$0xff]
        %v670 = vld [vmem:[%s6] sm:$0x1]
        %v672 = vlaneseq
        %v673 = vshrl.u32 %v672, 7
        %v674 = vsub.s32 0, %v673
        %v675 = vrot.slane %v670, %v674
        %v678 = vsel %vm350, %v663, 0
        %680 = vmatprep.subr.mxu0 0.0
        %681 = vmatpush1.msra.mxu0 %v666
        %682 = vmatprep.subr.mxu0 0.0
        %683 = vmatpush1.msra.mxu0 %v667
        %684 = vmatprep.subr.mxu0 0.0
        %685 = vmatpush1.msra.mxu0 %v668
        %686 = vmatprep.subr.mxu0 0.0
        %687 = vmatpush1.msra.mxu0 %v669
        %688 = vmatprep.subr.mxu0 0.0
        %689 = vmatpush1.msra.mxu0 0.0
        %690 = vmatprep.subr.mxu0 0.0
        %691 = vmatpush1.msra.mxu0 0.0
        %692 = vmatprep.subr.mxu0 0.0
        %693 = vmatpush1.msra.mxu0 0.0
        %694 = vmatprep.subr.mxu0 0.0
        %695 = vmatpush1.msra.mxu0 0.0
        %696 = vmatprep.subr.mxu0 0.0
        %697 = vmatpush1.msra.mxu0 0.0
        %698 = vmatprep.subr.mxu0 0.0
        %699 = vmatpush1.msra.mxu0 0.0
        %700 = vmatprep.subr.mxu0 0.0
        %701 = vmatpush1.msra.mxu0 0.0
        %702 = vmatprep.subr.mxu0 0.0
        %703 = vmatpush1.msra.mxu0 0.0
        %704 = vmatprep.subr.mxu0 0.0
        %705 = vmatpush1.msra.mxu0 0.0
        %706 = vmatprep.subr.mxu0 0.0
        %707 = vmatpush1.msra.mxu0 0.0
        %708 = vmatprep.subr.mxu0 0.0
        %709 = vmatpush1.msra.mxu0 0.0
        %710 = vmatprep.subr.mxu0 0.0
        %711 = vmatpush1.msra.mxu0 0.0
        %712 = vmatprep.subr.mxu0 0.0
        %713 = vmatpush1.msra.mxu0 0.0
        %714 = vmatprep.subr.mxu0 0.0
        %715 = vmatpush1.msra.mxu0 0.0
        %716 = vmatprep.subr.mxu0 0.0
        %717 = vmatpush1.msra.mxu0 0.0
        %718 = vmatprep.subr.mxu0 0.0
        %719 = vmatpush1.msra.mxu0 0.0
        %720 = vmatprep.subr.mxu0 0.0
        %721 = vmatpush1.msra.mxu0 0.0
        %722 = vmatprep.subr.mxu0 0.0
        %723 = vmatpush1.msra.mxu0 0.0
        %724 = vmatprep.subr.mxu0 0.0
        %725 = vmatpush1.msra.mxu0 0.0
        %726 = vmatprep.subr.mxu0 0.0
        %727 = vmatpush1.msra.mxu0 0.0
        %728 = vmatprep.subr.mxu0 0.0
        %729 = vmatpush1.msra.mxu0 0.0
        %730 = vmatprep.subr.mxu0 0.0
        %731 = vmatpush1.msra.mxu0 0.0
        %732 = vmatprep.subr.mxu0 0.0
        %733 = vmatpush1.msra.mxu0 0.0
        %734 = vmatprep.subr.mxu0 0.0
        %735 = vmatpush1.msra.mxu0 0.0
        %736 = vmatprep.subr.mxu0 0.0
        %737 = vmatpush1.msra.mxu0 0.0
        %738 = vmatprep.subr.mxu0 0.0
        %739 = vmatpush1.msra.mxu0 0.0
        %740 = vmatprep.subr.mxu0 0.0
        %741 = vmatpush1.msra.mxu0 0.0
        %742 = vmatprep.subr.mxu0 0.0
        %743 = vmatpush1.msra.mxu0 0.0
        %744 = vmatprep.mubr.f32.mxu0 0.0
        %745 = vmatmul.mubr.f32.gmra.mrb[0].mxu0 %v678
        %v746 = vpop.f32.mrb[0].mxu0
        %v747 = vadd.f32 %v675, %v746
        %v748 = vpop.f32.mrb[0].mxu0
        %749 = vdwg.mxu0
        %v750 = vmax.f32 %v747, 0.0
        %751 = vst.msk [vmem:[%s337] sm:$0xff] %vm350, %v750
        %s752 = sand.u32 %s186, 1
        %s753 = scalar_lea.sflag [#allocation4], %s752
        %s754 = sand.u32 %s186, 1
        %s755 = smul.addr %s754, 8
        %s756 = scalar_lea.vmem [#allocation10], %s755
        // Predicated region
        $region65: #{tpu_custom_call.1} parent=47 // pred_check
          %p757 = pneg %p196
        $region66: #{tpu_custom_call.1} parent=47 // pred_check_branch
          %759 = sbr.rel (%p757) target = $region68
        $region67: #{tpu_custom_call.1} parent=47 // pred_region
          %s761 = ssub.s32 128, 128
          %762 = vsyncadd %s753, %s761
          %s763 = smul.addr %s26, 128
          %s764 = scalar_lea.hbm %s7, %s763
          %s766 = sshll.u32 %s756, 4
          %s767 = int_to_ptr.vmem [resolvable:$true] %s766
          %769 = dma.vmem_to_hbm [thread:$0]  %s767, 128, %s764, %s753
        $region68: #{tpu_custom_call.1} parent=47 // pred_fallthru
          _
      $region48: #{tpu_custom_call.1} parent=5 // pred_fallthru
        _
      %p770 = scmp.le.s32.totalorder 2, %s21
      // Predicated region
      $region69: #{tpu_custom_call.1} parent=5 // pred_check
        %p771 = pneg %p770
      $region70: #{tpu_custom_call.1} parent=5 // pred_check_branch
        %773 = sbr.rel (%p771) target = $region72
      $region71: #{tpu_custom_call.1} parent=5 // pred_region
        %s774 = ssub.s32 %s21, 2
        // Predicated region
        $region73: #{tpu_custom_call.1} parent=71 // pred_check
          %p775 = pneg %p202
        $region74: #{tpu_custom_call.1} parent=71 // pred_check_branch
          %777 = sbr.rel (%p775) target = $region76
        $region75: #{tpu_custom_call.1} parent=71 // pred_region
          %s778 = sand.u32 %s187, 1
          %s779 = scalar_lea.sflag [#allocation4], %s778
          %s780 = sand.u32 %s187, 1
          %s781 = smul.addr %s780, 8
          %s782 = scalar_lea.vmem [#allocation10], %s781
          %783 = dma.done %s779, 128
        $region76: #{tpu_custom_call.1} parent=71 // pred_fallthru
          _
      $region72: #{tpu_custom_call.1} parent=5 // pred_fallthru
        _
    $region6: #{tpu_custom_call.1} parent=1 // loop_footer
      %s25 = sadd.s32 1, %s21
    $region7: #{tpu_custom_call.1} parent=1 // loop_footer_branch
      %20 = sbr.rel target = $region3
    $region8: #{tpu_custom_call.1} parent=1 // loop_exit
      _
    %784 = vsyncpa [#allocation3], 1
    %s785 = scalar_lea.sflag [#allocation3], 1
    %786 = vsyncpa %s785, 1
    %787 = vsyncpa [#allocation6], 1
    %788 = vsyncpa [#allocation9], 1
    %789 = vsyncpa [#allocation4], 1
    %s790 = scalar_lea.sflag [#allocation4], 1
    %791 = vsyncpa %s790, 1

</llo_original>
